<compile_context>
chip_gen: v7x
topology: tpu7x:2x2x1
jax: 0.10.0
libtpu: 0.0.40
codegen_flags: <defaults>
</compile_context>

<pallas_src>
import functools

import jax
import jax.numpy as jnp
from jax.experimental import pallas as pl
from jax.experimental.pallas import tpu as pltpu


HPAD = 128          # hidden widths padded to one full 128-lane tile (weights resident/tiny)
TILE_TARGET = 4096  # target rows per batch tile (working set ~8 MB incl. double-buffered x)


def _leaky_relu(x, slope=0.2):
    # max(x, slope*x) == leaky_relu for slope < 1; saves a VALU op vs jnp.where.
    return jnp.maximum(x, slope * x)


def _round_up(n, m):
    return ((n + m - 1) // m) * m


def _disc_kernel(x_ref, w1_ref, b1_ref, w2_ref, b2_ref, w3_ref, b3_ref, o_ref,
                 *, outsig: bool):
    # Stream x at caller dtype; cast to bf16 in-kernel (VPU has plenty of slack),
    # avoiding a separate XLA cast pass over HBM for f32 callers.
    x = x_ref[...].astype(jnp.bfloat16)                               # [tb, 66]

    # fc1 + leaky_relu  (bf16 MXU, f32 accumulate, f32 elementwise — v5e has no bf16 VPU)
    h1 = jnp.dot(x, w1_ref[...], preferred_element_type=jnp.float32) + b1_ref[...]
    h1 = _leaky_relu(h1)                                              # [tb, 128] f32

    # fc2 + leaky_relu; pack to bf16 once so only h1 stays a full-width f32 temporary.
    h2 = jnp.dot(h1.astype(jnp.bfloat16), w2_ref[...],
                 preferred_element_type=jnp.float32) + b2_ref[...]
    h2 = _leaky_relu(h2).astype(jnp.bfloat16)                         # [tb, 128] bf16

    # fc3 (out_features = 1) as a single MXU contraction that lands lane-dense:
    #   out[0, j] = sum_k w3[0, k] * h2[j, k]   ->   [1, tb]
    # (replaces the old VPU mul + XLU transpose + sublane reduce)
    out = jax.lax.dot_general(
        w3_ref[...], h2,
        dimension_numbers=(((1,), (1,)), ((), ())),
        preferred_element_type=jnp.float32,
    ) + b3_ref[...]                                                   # [1, tb] f32
    if outsig:
        out = jax.nn.sigmoid(out)
    o_ref[...] = out.astype(o_ref.dtype)


def _prep_params(params):
    """Cast/pad the logical [in, out] params to the kernel layout (bf16 weights for
    the MXU, f32 biases, hidden widths zero-padded to 128 lanes)."""
    w1, b1 = params["w1"], params["b1"]
    w2, b2 = params["w2"], params["b2"]
    w3, b3 = params["w3"], params["b3"]
    D, H1 = w1.shape
    H2 = w2.shape[1]
    assert w2.shape[0] == H1 and w3.shape == (H2, 1)
    assert H1 <= HPAD and H2 <= HPAD

    def pad_cols(a, n):
        return jnp.pad(a, ((0, 0), (0, n - a.shape[1])))

    def pad_rows(a, n):
        return jnp.pad(a, ((0, n - a.shape[0]), (0, 0)))

    w1p = pad_cols(w1, HPAD).astype(jnp.bfloat16)                     # [D, 128]
    b1p = pad_cols(b1.reshape(1, H1), HPAD).astype(jnp.float32)       # [1, 128]
    w2p = pad_cols(pad_rows(w2, HPAD), HPAD).astype(jnp.bfloat16)     # [128, 128]
    b2p = pad_cols(b2.reshape(1, H2), HPAD).astype(jnp.float32)       # [1, 128]
    w3p = pad_cols(w3.reshape(1, H2), HPAD).astype(jnp.bfloat16)      # [1, 128] (MXU row)
    b3p = b3.reshape(1, 1).astype(jnp.float32)                        # [1, 1]
    return w1p, b1p, w2p, b2p, w3p, b3p


def _select_tile_b(B, tile_b=None, target=TILE_TARGET):
    """Balanced batch tiling: >=2 near-equal 128-aligned tiles for medium/large B
    (pipelining + v7x megacore), single full-array tile for tiny B."""
    if tile_b is not None:
        tile_b = int(tile_b)
        if tile_b >= B:
            return B
        return min(B, max(128, _round_up(tile_b, 128)))
    if B <= 256:
        return B                                  # single tile: blocks == full arrays
    n = max(2, 2 * pl.cdiv(B, 2 * target))        # even number of steps, ~target rows each
    return min(B, max(128, _round_up(pl.cdiv(B, n), 128)))


def discriminator_forward(x, params, *, outsig: bool = False, tile_b: int | None = None):
    """x: [B, dim_data] (any float dtype). params: dict of pre-transposed ([in, out])
    weights/biases. Returns [B, 1] f32."""
    B, D = x.shape
    w1p, b1p, w2p, b2p, w3p, b3p = _prep_params(params)
    assert w1p.shape[0] == D

    tb = _select_tile_b(B, tile_b)
    grid = (pl.cdiv(B, tb),)
    # A partial last tile is fine: out-of-range output lanes are clipped on writeback
    # and rows never mix, so garbage rows in the padded x block cannot leak.
    # TODO(synk): if MLIR shows a per-tile relayout of the [tb, 66] lhs (K=66 not
    # lane-aligned), pad x into a VMEM scratch once per tile (not in HBM).

    kernel = functools.partial(_disc_kernel, outsig=outsig)

    out_row = pl.pallas_call(
        kernel,
        # Lane-dense output slab [1, B] (kernel writes [1, tb] rows) instead of a
        # [B, 1] column -> unmasked 128-lane stores; wrapper reshapes back.
        out_shape=jax.ShapeDtypeStruct((1, B), jnp.float32),
        grid_spec=pltpu.PrefetchScalarGridSpec(
            num_scalar_prefetch=0,
            grid=grid,
            in_specs=[
                pl.BlockSpec((tb, D), lambda i: (i, 0)),         # x (streamed, native dtype)
                pl.BlockSpec((D, HPAD), lambda i: (0, 0)),       # w1 (resident, bf16)
                pl.BlockSpec((1, HPAD), lambda i: (0, 0)),       # b1 (f32)
                pl.BlockSpec((HPAD, HPAD), lambda i: (0, 0)),    # w2 (resident, bf16)
                pl.BlockSpec((1, HPAD), lambda i: (0, 0)),       # b2 (f32)
                pl.BlockSpec((1, HPAD), lambda i: (0, 0)),       # w3 row (bf16, MXU path)
                pl.BlockSpec((1, 1), lambda i: (0, 0)),          # b3 (f32)
            ],
            out_specs=pl.BlockSpec((1, tb), lambda i: (0, i)),
        ),
        compiler_params=pltpu.CompilerParams(
            dimension_semantics=("parallel",),      # batch tiles shard across TCs (v7x)
            vmem_limit_bytes=32 * 1024 * 1024,      # ample for ~4k-row tiles on every gen
        ),
    )(x, w1p, b1p, w2p, b2p, w3p, b3p)

    return out_row.reshape(B, 1)   # back to the PyTorch [B, 1] layout


def init_params(key, dim_data=66):
    """Deterministic synthetic init (stand-in for utils.initialize_weights:
    N(0, 0.02) weights, zero biases). Weights stored pre-transposed as [in, out]."""
    # TODO(synk): utils.initialize_weights is external; replaced by this synthetic init.
    k1, k2, k3 = jax.random.split(key, 3)
    std = 0.02
    return {
        "w1": std * jax.random.normal(k1, (dim_data, dim_data), jnp.float32),
        "b1": jnp.zeros((1, dim_data), jnp.float32),
        "w2": std * jax.random.normal(k2, (dim_data, 100), jnp.float32),
        "b2": jnp.zeros((1, 100), jnp.float32),
        "w3": std * jax.random.normal(k3, (100, 1), jnp.float32),
        "b3": jnp.zeros((1, 1), jnp.float32),
    }


def _reference_forward(x, params, outsig=False):
    """Pure-JAX reference mirroring the kernel numerics (bf16 MXU inputs, f32
    accumulation / elementwise, bf16 fc3 contraction)."""
    xb = x.astype(jnp.bfloat16)
    w1 = params["w1"].astype(jnp.bfloat16)
    w2 = params["w2"].astype(jnp.bfloat16)
    w3 = params["w3"].astype(jnp.bfloat16)
    h1 = jnp.dot(xb, w1, preferred_element_type=jnp.float32) + params["b1"]
    h1 = jnp.maximum(h1, 0.2 * h1)
    h2 = jnp.dot(h1.astype(jnp.bfloat16), w2,
                 preferred_element_type=jnp.float32) + params["b2"]
    h2 = jnp.maximum(h2, 0.2 * h2).astype(jnp.bfloat16)
    out = jnp.dot(h2, w3, preferred_element_type=jnp.float32) + params["b3"]
    return jax.nn.sigmoid(out) if outsig else out


if __name__ == "__main__":
    key = jax.random.PRNGKey(0)
    kp, kx1, kx2 = jax.random.split(key, 3)

    dim_data = 66
    params = init_params(kp, dim_data=dim_data)

    # Small batch: single full-array tile, no sigmoid (module default boutsig=False).
    x_small = jax.random.normal(kx1, (8, dim_data), jnp.float32)
    out_s = jax.block_until_ready(discriminator_forward(x_small, params, outsig=False))
    ref_s = _reference_forward(x_small, params, outsig=False)
    assert out_s.shape == (8, 1), out_s.shape
    assert jnp.allclose(out_s, ref_s, atol=1e-4, rtol=1e-2), \
        float(jnp.max(jnp.abs(out_s - ref_s)))

    # Moderate batch: exercises balanced multi-step "parallel" grid (2 tiles of 1152),
    # a partial last tile (2300 rows), the MXU fc3 head, and the sigmoid path.
    B = 2300
    x_big = jax.random.normal(kx2, (B, dim_data), jnp.float32)
    out_b = jax.block_until_ready(discriminator_forward(x_big, params, outsig=True))
    ref_b = _reference_forward(x_big, params, outsig=True)
    assert out_b.shape == (B, 1), out_b.shape
    assert jnp.allclose(out_b, ref_b, atol=1e-4, rtol=1e-2), \
        float(jnp.max(jnp.abs(out_b - ref_b)))

    print("KERNEL_OK")
</pallas_src>

<mosaic_0001>
module attributes {stable_mosaic.version = 11 : i64} {
  func.func @_disc_kernel(%arg0: i32, %arg1: memref<8x66xf32, #tpu.memory_space<vmem>>, %arg2: memref<66x128xbf16, #tpu.memory_space<vmem>>, %arg3: memref<1x128xf32, #tpu.memory_space<vmem>>, %arg4: memref<128x128xbf16, #tpu.memory_space<vmem>>, %arg5: memref<1x128xf32, #tpu.memory_space<vmem>>, %arg6: memref<1x128xbf16, #tpu.memory_space<vmem>>, %arg7: memref<1x1xf32, #tpu.memory_space<vmem>>, %arg8: memref<1x8xf32, #tpu.memory_space<vmem>>) attributes {dimension_semantics = [#tpu.dimension_semantics<parallel>], iteration_bounds = array<i64: 1>, scalar_prefetch = 0 : i64, scratch_operands = 0 : i64, tpu.core_type = #tpu.core_type<tc>, window_params = [{transform_indices = @transform_0, window_bounds = array<i64: 8, 66>}, {pipeline_mode = #tpu.pipeline_mode<synchronous>, transform_indices = @transform_1, window_bounds = array<i64: 66, 128>}, {pipeline_mode = #tpu.pipeline_mode<synchronous>, transform_indices = @transform_2, window_bounds = array<i64: 1, 128>}, {pipeline_mode = #tpu.pipeline_mode<synchronous>, transform_indices = @transform_3, window_bounds = array<i64: 128, 128>}, {pipeline_mode = #tpu.pipeline_mode<synchronous>, transform_indices = @transform_4, window_bounds = array<i64: 1, 128>}, {pipeline_mode = #tpu.pipeline_mode<synchronous>, transform_indices = @transform_5, window_bounds = array<i64: 1, 128>}, {pipeline_mode = #tpu.pipeline_mode<synchronous>, transform_indices = @transform_6, window_bounds = array<i64: 1, 1>}, {transform_indices = @transform_7, window_bounds = array<i64: 1, 8>}]} {
    %c0 = arith.constant 0 : index
    %c0_0 = arith.constant 0 : index
    %0 = vector.load %arg1[%c0, %c0_0] : memref<8x66xf32, #tpu.memory_space<vmem>>, vector<8x66xf32>
    %1 = arith.truncf %0 : vector<8x66xf32> to vector<8x66xbf16>
    %c0_1 = arith.constant 0 : index
    %c0_2 = arith.constant 0 : index
    %2 = vector.load %arg2[%c0_1, %c0_2] : memref<66x128xbf16, #tpu.memory_space<vmem>>, vector<66x128xbf16>
    %cst = arith.constant dense<0.000000e+00> : vector<8x128xf32>
    %3 = tpu.matmul %1, %2, %cst {dimension_numbers = #tpu.dot_dimension_numbers<[1], [0], [0], [1], [0, 0, 1, 1], [], []>} : vector<8x66xbf16>, vector<66x128xbf16>, vector<8x128xf32> -> vector<8x128xf32>
    %c0_3 = arith.constant 0 : index
    %c0_4 = arith.constant 0 : index
    %4 = vector.load %arg3[%c0_3, %c0_4] : memref<1x128xf32, #tpu.memory_space<vmem>>, vector<1x128xf32>
    %5 = vector.broadcast %4 : vector<1x128xf32> to vector<8x128xf32>
    %6 = arith.addf %3, %5 : vector<8x128xf32>
    %cst_5 = arith.constant 2.000000e-01 : f32
    %7 = vector.broadcast %cst_5 : f32 to vector<8x128xf32>
    %8 = arith.mulf %7, %6 : vector<8x128xf32>
    %9 = arith.maximumf %6, %8 : vector<8x128xf32>
    %10 = arith.truncf %9 : vector<8x128xf32> to vector<8x128xbf16>
    %c0_6 = arith.constant 0 : index
    %c0_7 = arith.constant 0 : index
    %11 = vector.load %arg4[%c0_6, %c0_7] : memref<128x128xbf16, #tpu.memory_space<vmem>>, vector<128x128xbf16>
    %cst_8 = arith.constant dense<0.000000e+00> : vector<8x128xf32>
    %12 = tpu.matmul %10, %11, %cst_8 {dimension_numbers = #tpu.dot_dimension_numbers<[1], [0], [0], [1], [0, 0, 1, 1], [], []>} : vector<8x128xbf16>, vector<128x128xbf16>, vector<8x128xf32> -> vector<8x128xf32>
    %c0_9 = arith.constant 0 : index
    %c0_10 = arith.constant 0 : index
    %13 = vector.load %arg5[%c0_9, %c0_10] : memref<1x128xf32, #tpu.memory_space<vmem>>, vector<1x128xf32>
    %14 = vector.broadcast %13 : vector<1x128xf32> to vector<8x128xf32>
    %15 = arith.addf %12, %14 : vector<8x128xf32>
    %cst_11 = arith.constant 2.000000e-01 : f32
    %16 = vector.broadcast %cst_11 : f32 to vector<8x128xf32>
    %17 = arith.mulf %16, %15 : vector<8x128xf32>
    %18 = arith.maximumf %15, %17 : vector<8x128xf32>
    %19 = arith.truncf %18 : vector<8x128xf32> to vector<8x128xbf16>
    %c0_12 = arith.constant 0 : index
    %c0_13 = arith.constant 0 : index
    %20 = vector.load %arg6[%c0_12, %c0_13] : memref<1x128xbf16, #tpu.memory_space<vmem>>, vector<1x128xbf16>
    %cst_14 = arith.constant dense<0.000000e+00> : vector<1x8xf32>
    %21 = tpu.matmul %20, %19, %cst_14 {dimension_numbers = #tpu.dot_dimension_numbers<[1], [1], [0], [0], [0, 0, 1, 0], [], []>} : vector<1x128xbf16>, vector<8x128xbf16>, vector<1x8xf32> -> vector<1x8xf32>
    %c0_15 = arith.constant 0 : index
    %c0_16 = arith.constant 0 : index
    %22 = vector.load %arg7[%c0_15, %c0_16] : memref<1x1xf32, #tpu.memory_space<vmem>>, vector<1x1xf32>
    %23 = vector.broadcast %22 : vector<1x1xf32> to vector<1x8xf32>
    %24 = arith.addf %21, %23 : vector<1x8xf32>
    %c0_17 = arith.constant 0 : index
    %c0_18 = arith.constant 0 : index
    %25 = vector.load %arg8[%c0_17, %c0_18] : memref<1x8xf32, #tpu.memory_space<vmem>>, vector<1x8xf32>
    tpu.vector_store %arg8[%c0_17, %c0_18], %24 {strides = array<i32>} : memref<1x8xf32, #tpu.memory_space<vmem>>, vector<1x8xf32>,
    return
  }
  func.func @transform_0(%arg0: i32) -> (i32, i32) {
    %c0_i32 = arith.constant 0 : i32
    %c0_i32_0 = arith.constant 0 : i32
    return %arg0, %c0_i32 : i32, i32
  }
  func.func @transform_1(%arg0: i32) -> (i32, i32) {
    %c0_i32 = arith.constant 0 : i32
    %c0_i32_0 = arith.constant 0 : i32
    %c0_i32_1 = arith.constant 0 : i32
    return %c0_i32, %c0_i32_0 : i32, i32
  }
  func.func @transform_2(%arg0: i32) -> (i32, i32) {
    %c0_i32 = arith.constant 0 : i32
    %c0_i32_0 = arith.constant 0 : i32
    %c0_i32_1 = arith.constant 0 : i32
    return %c0_i32, %c0_i32_0 : i32, i32
  }
  func.func @transform_3(%arg0: i32) -> (i32, i32) {
    %c0_i32 = arith.constant 0 : i32
    %c0_i32_0 = arith.constant 0 : i32
    %c0_i32_1 = arith.constant 0 : i32
    return %c0_i32, %c0_i32_0 : i32, i32
  }
  func.func @transform_4(%arg0: i32) -> (i32, i32) {
    %c0_i32 = arith.constant 0 : i32
    %c0_i32_0 = arith.constant 0 : i32
    %c0_i32_1 = arith.constant 0 : i32
    return %c0_i32, %c0_i32_0 : i32, i32
  }
  func.func @transform_5(%arg0: i32) -> (i32, i32) {
    %c0_i32 = arith.constant 0 : i32
    %c0_i32_0 = arith.constant 0 : i32
    %c0_i32_1 = arith.constant 0 : i32
    return %c0_i32, %c0_i32_0 : i32, i32
  }
  func.func @transform_6(%arg0: i32) -> (i32, i32) {
    %c0_i32 = arith.constant 0 : i32
    %c0_i32_0 = arith.constant 0 : i32
    %c0_i32_1 = arith.constant 0 : i32
    return %c0_i32, %c0_i32_0 : i32, i32
  }
  func.func @transform_7(%arg0: i32) -> (i32, i32) {
    %c0_i32 = arith.constant 0 : i32
    %c0_i32_0 = arith.constant 0 : i32
    return %c0_i32, %arg0 : i32, i32
  }
}

</mosaic_0001>

<llo_original>
// kernel: tpu_custom_call.1
$region0: #{tpu_custom_call.1}
  #allocation0 [shape = 'u32[]', space=smem, size = 0x4, offset = 0x4, fixed_abs, tag = 'smem constant byte address 0x4 - core index']
  #allocation1 [shape = 'u32[144,128]{1,0:T(1,128)}', space=vmem, size = 0x12000, scoped, tag = 'internal scratch']
  #allocation2 [shape = 'f32[1,1]{1,0:T(1,128)S(1)}', space=vmem, size = 0x200, scoped, tag = 'scoped memory for tpu_custom_call.1']
  %s0 = inlined_call_operand.hbm [shape: f32[8,66], index: 0, kind: input, shape index: {}]
  %s1 = inlined_call_operand.hbm [shape: bf16[66,128], index: 1, kind: input, shape index: {}]
  %s2 = inlined_call_operand.vmem [shape: f32[1,128], index: 2, kind: input, shape index: {}]
  %s3 = inlined_call_operand.hbm [shape: bf16[128,128], index: 3, kind: input, shape index: {}]
  %s4 = inlined_call_operand.vmem [shape: f32[1,128], index: 4, kind: input, shape index: {}]
  %s5 = inlined_call_operand.vmem [shape: bf16[1,128], index: 5, kind: input, shape index: {}]
  %s6 = inlined_call_operand.<no memory space> [shape: f32[1,1], index: 6, kind: input, shape index: {}]
  %s7 = inlined_call_operand.hbm [shape: f32[1,8], index: 7, kind: output, shape index: {}]
  %s8 = sld [smem:[#allocation0]]
  $region50: #{tpu_custom_call.1} parent=0
    _
  %s10 = ssub.s32 1, %s8
  %s11 = scalar_select 0, %s10, %s8
  %v12 = vstv %s6
  %13 = vst [vmem:[#allocation2] sm:$0x1] %v12
  $region1: #{tpu_custom_call.1} parent=0
    #allocation3 [shape = 'u8[4096]{0}', space=vmem, size = 0x1000, scoped, tag = 'input window, operand 0, single buffered']
    #allocation4 [shape = 's32[1]{0}', space=sflag, size = 0x4, scoped, tag = 'scoped memory for tpu_custom_call.1']
    #allocation5 [shape = 's32[1]{0}', space=sflag, size = 0x4, scoped, tag = 'scoped memory for tpu_custom_call.1']
    #allocation6 [shape = 'u8[18432]{0}', space=vmem, size = 0x4800, scoped, tag = 'input window, operand 1, single buffered']
    #allocation7 [shape = 's32[1]{0}', space=sflag, size = 0x4, scoped, tag = 'scoped memory for tpu_custom_call.1']
    #allocation8 [shape = 'u8[32768]{0}', space=vmem, size = 0x8000, scoped, tag = 'input window, operand 3, single buffered']
    #allocation9 [shape = 'u8[512]{0}', space=vmem, size = 0x400, scoped, tag = 'output window, operand 0, single buffered']
    %14 = vsyncpa [#allocation4], 0
    %15 = vsyncpa [#allocation7], 0
    %16 = vsyncpa [#allocation5], 0
    // Predicated region
    $region2: #{tpu_custom_call.1} parent=1 // pred_check
      _
    $region3: #{tpu_custom_call.1} parent=1 // pred_check_branch
      %18 = sbr.rel (0) target = $region5
    $region4: #{tpu_custom_call.1} parent=1 // pred_region
      %s20 = ssub.s32 128, 128
      %21 = vsyncadd [#allocation4], %s20
      %s23 = sshll.u32 [#allocation3], 4
      %s24 = int_to_ptr.vmem [resolvable:$true] %s23
      %26 = dma.hbm_to_vmem [thread:$0]  %s0, 128, %s24, [#allocation4]
    $region5: #{tpu_custom_call.1} parent=1 // pred_fallthru
      _
    // Predicated region
    $region6: #{tpu_custom_call.1} parent=1 // pred_check
      _
    $region7: #{tpu_custom_call.1} parent=1 // pred_check_branch
      %28 = sbr.rel (0) target = $region9
    $region8: #{tpu_custom_call.1} parent=1 // pred_region
      %s30 = ssub.s32 576, 576
      %31 = vsyncadd [#allocation7], %s30
      %s32 = sshll.u32 [#allocation6], 4
      %s33 = int_to_ptr.vmem [resolvable:$true] %s32
      %38 = dma.hbm_to_vmem [thread:$0]  %s1, 576, %s33, [#allocation7], 64, 64, 4
    $region9: #{tpu_custom_call.1} parent=1 // pred_fallthru
      _
    // Predicated region
    $region10: #{tpu_custom_call.1} parent=1 // pred_check
      _
    $region11: #{tpu_custom_call.1} parent=1 // pred_check_branch
      %40 = sbr.rel (0) target = $region13
    $region12: #{tpu_custom_call.1} parent=1 // pred_region
      _
    $region13: #{tpu_custom_call.1} parent=1 // pred_fallthru
      _
    // Predicated region
    $region14: #{tpu_custom_call.1} parent=1 // pred_check
      _
    $region15: #{tpu_custom_call.1} parent=1 // pred_check_branch
      %42 = sbr.rel (0) target = $region17
    $region16: #{tpu_custom_call.1} parent=1 // pred_region
      %s44 = ssub.s32 1024, 1024
      %45 = vsyncadd [#allocation7], %s44
      %s46 = sshll.u32 [#allocation8], 4
      %s47 = int_to_ptr.vmem [resolvable:$true] %s46
      %52 = dma.hbm_to_vmem [thread:$0]  %s3, 1024, %s47, [#allocation7], 64, 64, 4
    $region17: #{tpu_custom_call.1} parent=1 // pred_fallthru
      _
    // Predicated region
    $region18: #{tpu_custom_call.1} parent=1 // pred_check
      _
    $region19: #{tpu_custom_call.1} parent=1 // pred_check_branch
      %54 = sbr.rel (0) target = $region21
    $region20: #{tpu_custom_call.1} parent=1 // pred_region
      _
    $region21: #{tpu_custom_call.1} parent=1 // pred_fallthru
      _
    // Predicated region
    $region22: #{tpu_custom_call.1} parent=1 // pred_check
      _
    $region23: #{tpu_custom_call.1} parent=1 // pred_check_branch
      %56 = sbr.rel (0) target = $region25
    $region24: #{tpu_custom_call.1} parent=1 // pred_region
      _
    $region25: #{tpu_custom_call.1} parent=1 // pred_fallthru
      _
    // Predicated region
    $region26: #{tpu_custom_call.1} parent=1 // pred_check
      _
    $region27: #{tpu_custom_call.1} parent=1 // pred_check_branch
      %58 = sbr.rel (0) target = $region29
    $region28: #{tpu_custom_call.1} parent=1 // pred_region
      _
    $region29: #{tpu_custom_call.1} parent=1 // pred_fallthru
      _
    // Predicated region
    $region30: #{tpu_custom_call.1} parent=1 // pred_check
      _
    $region31: #{tpu_custom_call.1} parent=1 // pred_check_branch
      %60 = sbr.rel (0) target = $region33
    $region32: #{tpu_custom_call.1} parent=1 // pred_region
      %61 = dma.done [#allocation4], 128
    $region33: #{tpu_custom_call.1} parent=1 // pred_fallthru
      _
    // Predicated region
    $region34: #{tpu_custom_call.1} parent=1 // pred_check
      _
    $region35: #{tpu_custom_call.1} parent=1 // pred_check_branch
      %63 = sbr.rel (0) target = $region37
    $region36: #{tpu_custom_call.1} parent=1 // pred_region
      %64 = dma.done [#allocation7], 576
    $region37: #{tpu_custom_call.1} parent=1 // pred_fallthru
      _
    // Predicated region
    $region38: #{tpu_custom_call.1} parent=1 // pred_check
      _
    $region39: #{tpu_custom_call.1} parent=1 // pred_check_branch
      %66 = sbr.rel (0) target = $region41
    $region40: #{tpu_custom_call.1} parent=1 // pred_region
      %67 = dma.done [#allocation7], 1024
    $region41: #{tpu_custom_call.1} parent=1 // pred_fallthru
      _
    %v69 = vld [vmem:[#allocation3] sm:$0xff]
    %v70 = vpack.c.bf16 %v69, %v69
    %v71 = vld [vmem:[#allocation6] sm:$0xf]
    %v72 = vld [vmem:[#allocation6 + $0x4] sm:$0xf]
    %v73 = vld [vmem:[#allocation6 + $0x8] sm:$0xf]
    %v74 = vld [vmem:[#allocation6 + $0xc] sm:$0xf]
    %v75 = vld [vmem:[#allocation6 + $0x10] sm:$0xf]
    %v76 = vld [vmem:[#allocation6 + $0x14] sm:$0xf]
    %v77 = vld [vmem:[#allocation6 + $0x18] sm:$0xf]
    %v78 = vld [vmem:[#allocation6 + $0x1c] sm:$0xf]
    %v79 = vld [vmem:[#allocation6 + $0x20] sm:$0x1]
    %v80 = vld [vmem:[%s2] sm:$0x1]
    %v82 = vlaneseq
    %v83 = vshrl.u32 %v82, 7
    %v84 = vsub.s32 0, %v83
    %v85 = vrot.slane %v80, %v84
    %v96 = vunpack.c.l.b16 %v71
    %v97 = vunpack.c.l.b16 %v72
    %v98 = vunpack.c.l.b16 %v73
    %v99 = vunpack.c.l.b16 %v74
    %v100 = vunpack.c.l.b16 %v75
    %v101 = vunpack.c.l.b16 %v76
    %v102 = vunpack.c.l.b16 %v77
    %v103 = vunpack.c.l.b16 %v78
    %v104 = vunpack.c.l.b16 %v79
    %v105 = vpack.c.b16 %v97, %v96
    %v106 = vpack.c.b16 %v99, %v98
    %v107 = vpack.c.b16 %v101, %v100
    %v108 = vpack.c.b16 %v103, %v102
    %v109 = vpack.c.b16 %v104, %v104
    %vm114 = vcmask 539648
    %v116 = vsel %vm114, %v70, 0
    %vm118 = vcmask 1040384
    %v120 = vsel %vm118, %v109, 0
    %122 = vmatprep.subr.bf16.mxu0 0
    %123 = vmatpush1.bf16.msra.mxu0 %v105
    %124 = vmatprep.subr.bf16.mxu0 0
    %125 = vmatpush1.bf16.msra.mxu0 %v106
    %126 = vmatprep.subr.bf16.mxu0 0
    %127 = vmatpush1.bf16.msra.mxu0 %v107
    %128 = vmatprep.subr.bf16.mxu0 0
    %129 = vmatpush1.bf16.msra.mxu0 %v108
    %130 = vmatprep.subr.bf16.mxu0 0
    %131 = vmatpush1.bf16.msra.mxu0 %v120
    %132 = vmatprep.subr.bf16.mxu0 0
    %133 = vmatpush1.bf16.msra.mxu0 0
    %134 = vmatprep.subr.bf16.mxu0 0
    %135 = vmatpush1.bf16.msra.mxu0 0
    %136 = vmatprep.subr.bf16.mxu0 0
    %137 = vmatpush1.bf16.msra.mxu0 0
    %138 = vmatprep.subr.bf16.mxu0 0
    %139 = vmatpush1.bf16.msra.mxu0 0
    %140 = vmatprep.subr.bf16.mxu0 0
    %141 = vmatpush1.bf16.msra.mxu0 0
    %142 = vmatprep.subr.bf16.mxu0 0
    %143 = vmatpush1.bf16.msra.mxu0 0
    %144 = vmatprep.subr.bf16.mxu0 0
    %145 = vmatpush1.bf16.msra.mxu0 0
    %146 = vmatprep.subr.bf16.mxu0 0
    %147 = vmatpush1.bf16.msra.mxu0 0
    %148 = vmatprep.subr.bf16.mxu0 0
    %149 = vmatpush1.bf16.msra.mxu0 0
    %150 = vmatprep.subr.bf16.mxu0 0
    %151 = vmatpush1.bf16.msra.mxu0 0
    %152 = vmatprep.subr.bf16.mxu0 0
    %153 = vmatpush1.bf16.msra.mxu0 0
    %154 = vmatprep.mubr.bf16.mxu0 0
    %155 = vmatmul.mubr.bf16.gmra.mrb[0].mxu0 %v116
    %v156 = vpop.f32.mrb[0].mxu0
    %v157 = vadd.f32 %v85, %v156
    %v158 = vpop.f32.mrb[0].mxu0
    %v159 = vpop.f32.mrb[0].mxu0
    %v160 = vpop.f32.mrb[0].mxu0
    %161 = vdwg.mxu0
    %v162 = vmul.f32 %v157, 0.2
    %v163 = vmax.f32 %v157, %v162
    %v164 = vpack.c.bf16 %v163, %v163
    %v165 = vld [vmem:[#allocation8] sm:$0xf]
    %v166 = vld [vmem:[#allocation8 + $0x4] sm:$0xf]
    %v167 = vld [vmem:[#allocation8 + $0x8] sm:$0xf]
    %v168 = vld [vmem:[#allocation8 + $0xc] sm:$0xf]
    %v169 = vld [vmem:[#allocation8 + $0x10] sm:$0xf]
    %v170 = vld [vmem:[#allocation8 + $0x14] sm:$0xf]
    %v171 = vld [vmem:[#allocation8 + $0x18] sm:$0xf]
    %v172 = vld [vmem:[#allocation8 + $0x1c] sm:$0xf]
    %v173 = vld [vmem:[#allocation8 + $0x20] sm:$0xf]
    %v174 = vld [vmem:[#allocation8 + $0x24] sm:$0xf]
    %v175 = vld [vmem:[#allocation8 + $0x28] sm:$0xf]
    %v176 = vld [vmem:[#allocation8 + $0x2c] sm:$0xf]
    %v177 = vld [vmem:[#allocation8 + $0x30] sm:$0xf]
    %v178 = vld [vmem:[#allocation8 + $0x34] sm:$0xf]
    %v179 = vld [vmem:[#allocation8 + $0x38] sm:$0xf]
    %v180 = vld [vmem:[#allocation8 + $0x3c] sm:$0xf]
    %v181 = vld [vmem:[%s4] sm:$0x1]
    %v183 = vlaneseq
    %v184 = vshrl.u32 %v183, 7
    %v185 = vsub.s32 0, %v184
    %v186 = vrot.slane %v181, %v185
    %v204 = vunpack.c.l.b16 %v165
    %v205 = vunpack.c.l.b16 %v166
    %v206 = vunpack.c.l.b16 %v167
    %v207 = vunpack.c.l.b16 %v168
    %v208 = vunpack.c.l.b16 %v169
    %v209 = vunpack.c.l.b16 %v170
    %v210 = vunpack.c.l.b16 %v171
    %v211 = vunpack.c.l.b16 %v172
    %v212 = vunpack.c.l.b16 %v173
    %v213 = vunpack.c.l.b16 %v174
    %v214 = vunpack.c.l.b16 %v175
    %v215 = vunpack.c.l.b16 %v176
    %v216 = vunpack.c.l.b16 %v177
    %v217 = vunpack.c.l.b16 %v178
    %v218 = vunpack.c.l.b16 %v179
    %v219 = vunpack.c.l.b16 %v180
    %v220 = vpack.c.b16 %v205, %v204
    %v221 = vpack.c.b16 %v207, %v206
    %v222 = vpack.c.b16 %v209, %v208
    %v223 = vpack.c.b16 %v211, %v210
    %v224 = vpack.c.b16 %v213, %v212
    %v225 = vpack.c.b16 %v215, %v214
    %v226 = vpack.c.b16 %v217, %v216
    %v227 = vpack.c.b16 %v219, %v218
    %236 = vmatprep.subr.bf16.mxu0 0
    %237 = vmatpush1.bf16.msra.mxu0 %v220
    %238 = vmatprep.subr.bf16.mxu0 0
    %239 = vmatpush1.bf16.msra.mxu0 %v221
    %240 = vmatprep.subr.bf16.mxu0 0
    %241 = vmatpush1.bf16.msra.mxu0 %v222
    %242 = vmatprep.subr.bf16.mxu0 0
    %243 = vmatpush1.bf16.msra.mxu0 %v223
    %244 = vmatprep.subr.bf16.mxu0 0
    %245 = vmatpush1.bf16.msra.mxu0 %v224
    %246 = vmatprep.subr.bf16.mxu0 0
    %247 = vmatpush1.bf16.msra.mxu0 %v225
    %248 = vmatprep.subr.bf16.mxu0 0
    %249 = vmatpush1.bf16.msra.mxu0 %v226
    %250 = vmatprep.subr.bf16.mxu0 0
    %251 = vmatpush1.bf16.msra.mxu0 %v227
    %252 = vmatprep.subr.bf16.mxu0 0
    %253 = vmatpush1.bf16.msra.mxu0 0
    %254 = vmatprep.subr.bf16.mxu0 0
    %255 = vmatpush1.bf16.msra.mxu0 0
    %256 = vmatprep.subr.bf16.mxu0 0
    %257 = vmatpush1.bf16.msra.mxu0 0
    %258 = vmatprep.subr.bf16.mxu0 0
    %259 = vmatpush1.bf16.msra.mxu0 0
    %260 = vmatprep.subr.bf16.mxu0 0
    %261 = vmatpush1.bf16.msra.mxu0 0
    %262 = vmatprep.subr.bf16.mxu0 0
    %263 = vmatpush1.bf16.msra.mxu0 0
    %264 = vmatprep.subr.bf16.mxu0 0
    %265 = vmatpush1.bf16.msra.mxu0 0
    %266 = vmatprep.subr.bf16.mxu0 0
    %267 = vmatpush1.bf16.msra.mxu0 0
    %268 = vmatprep.mubr.bf16.mxu0 0
    %269 = vmatmul.mubr.bf16.gmra.mrb[0].mxu0 %v164
    %v270 = vpop.f32.mrb[0].mxu0
    %v271 = vadd.f32 %v186, %v270
    %v272 = vpop.f32.mrb[0].mxu0
    %v273 = vpop.f32.mrb[0].mxu0
    %v274 = vpop.f32.mrb[0].mxu0
    %275 = vdwg.mxu0
    %v276 = vmul.f32 %v271, 0.2
    %v277 = vmax.f32 %v271, %v276
    %v278 = vpack.c.bf16 %v277, %v277
    %v279 = vld [vmem:[%s5] sm:$0x1]
    %v280 = vld [vmem:[#allocation2] sm:$0x1]
    %282 = vset.pattern.permute.xlu0 0
    %283 = vperm.xlu0 %282, %v280
    %v284 = vpop.permute.xlu0 %283
    %v286 = vlaneseq
    %v287 = vshrl.u32 %v286, 7
    %v288 = vsub.s32 0, %v287
    %v289 = vrot.slane %v284, %v288
    %290 = vmatprep.subr.bf16.mxu0 0
    %291 = vmatpush1.bf16.xpose.msra.mxu0 %v278
    %292 = vmatprep.subr.bf16.mxu0 0
    %293 = vmatpush1.bf16.xpose.msra.mxu0 0
    %294 = vmatprep.subr.bf16.mxu0 0
    %295 = vmatpush1.bf16.xpose.msra.mxu0 0
    %296 = vmatprep.subr.bf16.mxu0 0
    %297 = vmatpush1.bf16.xpose.msra.mxu0 0
    %298 = vmatprep.subr.bf16.mxu0 0
    %299 = vmatpush1.bf16.xpose.msra.mxu0 0
    %300 = vmatprep.subr.bf16.mxu0 0
    %301 = vmatpush1.bf16.xpose.msra.mxu0 0
    %302 = vmatprep.subr.bf16.mxu0 0
    %303 = vmatpush1.bf16.xpose.msra.mxu0 0
    %304 = vmatprep.subr.bf16.mxu0 0
    %305 = vmatpush1.bf16.xpose.msra.mxu0 0
    %306 = vmatprep.subr.bf16.mxu0 0
    %307 = vmatpush1.bf16.xpose.msra.mxu0 0
    %308 = vmatprep.subr.bf16.mxu0 0
    %309 = vmatpush1.bf16.xpose.msra.mxu0 0
    %310 = vmatprep.subr.bf16.mxu0 0
    %311 = vmatpush1.bf16.xpose.msra.mxu0 0
    %312 = vmatprep.subr.bf16.mxu0 0
    %313 = vmatpush1.bf16.xpose.msra.mxu0 0
    %314 = vmatprep.subr.bf16.mxu0 0
    %315 = vmatpush1.bf16.xpose.msra.mxu0 0
    %316 = vmatprep.subr.bf16.mxu0 0
    %317 = vmatpush1.bf16.xpose.msra.mxu0 0
    %318 = vmatprep.subr.bf16.mxu0 0
    %319 = vmatpush1.bf16.xpose.msra.mxu0 0
    %320 = vmatprep.subr.bf16.mxu0 0
    %321 = vmatpush1.bf16.xpose.msra.mxu0 0
    %322 = vmatprep.mubr.bf16.mxu0 0
    %323 = vmatmul.mubr.bf16.gmra.mrb[0].mxu0 %v279
    %v324 = vpop.f32.mrb[0].mxu0
    %v325 = vadd.f32 %v289, %v324
    %v326 = vpop.f32.mrb[0].mxu0
    %v327 = vpop.f32.mrb[0].mxu0
    %v328 = vpop.f32.mrb[0].mxu0
    %329 = vdwg.mxu0
    %vm330 = vcmask 57344
    %331 = vst.msk [vmem:[#allocation9] sm:$0x1] %vm330, %v325
    // Predicated region
    $region42: #{tpu_custom_call.1} parent=1 // pred_check
      _
    $region43: #{tpu_custom_call.1} parent=1 // pred_check_branch
      %333 = sbr.rel (0) target = $region45
    $region44: #{tpu_custom_call.1} parent=1 // pred_region
      %s335 = ssub.s32 16, 16
      %336 = vsyncadd [#allocation5], %s335
      %s338 = sshll.u32 [#allocation9], 4
      %s339 = int_to_ptr.vmem [resolvable:$true] %s338
      %341 = dma.vmem_to_hbm [thread:$0]  %s339, 16, %s7, [#allocation5]
    $region45: #{tpu_custom_call.1} parent=1 // pred_fallthru
      _
    // Predicated region
    $region46: #{tpu_custom_call.1} parent=1 // pred_check
      _
    $region47: #{tpu_custom_call.1} parent=1 // pred_check_branch
      %343 = sbr.rel (0) target = $region49
    $region48: #{tpu_custom_call.1} parent=1 // pred_region
      %344 = dma.done [#allocation5], 16
    $region49: #{tpu_custom_call.1} parent=1 // pred_fallthru
      _
    %345 = vsyncpa [#allocation4], 1
    %346 = vsyncpa [#allocation7], 1
    %347 = vsyncpa [#allocation5], 1

</llo_original>
